<compile_context>
chip_gen: v5e
topology: v5e:2x2
jax: 0.10.0
libtpu: 0.0.40
codegen_flags: <defaults>
</compile_context>

<pallas_src>
import functools

import jax
import jax.numpy as jnp
from jax.experimental import pallas as pl
from jax.experimental.pallas import tpu as pltpu

INPUT_SIZE = 78
NUM_CLASSES = 15
HIDDEN = (128, 64, 32)


def _round_up(a, m):
    return (a + m - 1) // m * m


def mlp_kernel(x_ref,
               w1_ref, b1_ref,
               w2_ref, b2_ref,
               w3_ref, b3_ref,
               w4_ref, b4_ref,
               o_ref):
    # x_ref: (TB, 78) f32 ; weights bf16 ; biases f32 (1, out) ; o_ref: (TB, 15) f32
    x = x_ref[...].astype(jnp.bfloat16)                      # cast hidden under DMA
    h = jnp.dot(x, w1_ref[...], preferred_element_type=jnp.float32) + b1_ref[...]
    h = jnp.maximum(h, 0.0).astype(jnp.bfloat16)
    h = jnp.dot(h, w2_ref[...], preferred_element_type=jnp.float32) + b2_ref[...]
    h = jnp.maximum(h, 0.0).astype(jnp.bfloat16)
    h = jnp.dot(h, w3_ref[...], preferred_element_type=jnp.float32) + b3_ref[...]
    h = jnp.maximum(h, 0.0).astype(jnp.bfloat16)
    o_ref[...] = jnp.dot(h, w4_ref[...], preferred_element_type=jnp.float32) + b4_ref[...]


def prepare_params(params):
    """One-time parameter prep (hoisted out of the per-call path):
    bf16 weights stored as (in, out), f32 biases stored as (1, out)."""
    prepped = []
    for w, b in params:
        prepped.append((jnp.asarray(w, jnp.bfloat16),
                        jnp.asarray(b, jnp.float32).reshape(1, -1)))
    return tuple(prepped)


@functools.partial(jax.jit, static_argnames=("tb_max",))
def net_threat_model_v0(x, prepped_params, tb_max=4096):
    """x: (B, INPUT_SIZE) float32 -> (B, NUM_CLASSES) float32."""
    (w1, b1), (w2, b2), (w3, b3), (w4, b4) = prepped_params
    B = x.shape[0]
    x = x.astype(jnp.float32)

    # Batch tile: multiple of 16 (bf16 sublane packing; also satisfies the (8,128)
    # BlockSpec divisibility rule for any caller-supplied tb_max).
    tb_max = max(16, (int(tb_max) // 16) * 16)
    TB = min(tb_max, _round_up(B, 16))
    grid = (pl.cdiv(B, TB),)          # ragged last block handled by Pallas

    def const_spec(shape):
        return pl.BlockSpec(shape, lambda i: (0, 0))   # weights/biases stay VMEM-resident

    mac = INPUT_SIZE * HIDDEN[0] + HIDDEN[0] * HIDDEN[1] + HIDDEN[1] * HIDDEN[2] \
        + HIDDEN[2] * NUM_CLASSES
    cost = pl.CostEstimate(
        flops=2 * B * mac,
        transcendentals=0,
        bytes_accessed=B * (INPUT_SIZE * 4 + NUM_CLASSES * 4)
        + 2 * mac + 4 * (HIDDEN[0] + HIDDEN[1] + HIDDEN[2] + NUM_CLASSES),
    )

    return pl.pallas_call(
        mlp_kernel,
        out_shape=jax.ShapeDtypeStruct((B, NUM_CLASSES), jnp.float32),
        grid=grid,
        in_specs=[
            pl.BlockSpec((TB, INPUT_SIZE), lambda i: (i, 0)),   # x: batch-tiled, raw f32
            const_spec(w1.shape), const_spec(b1.shape),
            const_spec(w2.shape), const_spec(b2.shape),
            const_spec(w3.shape), const_spec(b3.shape),
            const_spec(w4.shape), const_spec(b4.shape),
        ],
        out_specs=pl.BlockSpec((TB, NUM_CLASSES), lambda i: (i, 0)),
        compiler_params=pltpu.CompilerParams(
            dimension_semantics=("parallel",)),
        cost_estimate=cost,
    )(x, w1, b1, w2, b2, w3, b3, w4, b4)


def init_params(key):
    """Deterministic init mimicking PyTorch's default Linear init
    (uniform in +-1/sqrt(fan_in)). Weights stored as (in, out)."""
    dims = (INPUT_SIZE,) + HIDDEN + (NUM_CLASSES,)
    params = []
    for i in range(len(dims) - 1):
        fan_in, fan_out = dims[i], dims[i + 1]
        key, kw, kb = jax.random.split(key, 3)
        bound = 1.0 / (fan_in ** 0.5)
        w = jax.random.uniform(kw, (fan_in, fan_out), jnp.float32, -bound, bound)
        b = jax.random.uniform(kb, (1, fan_out), jnp.float32, -bound, bound)
        params.append((w, b))
    return params


def reference_forward(x, params):
    h = x
    for i, (w, b) in enumerate(params):
        h = h @ w + b
        if i < len(params) - 1:
            h = jnp.maximum(h, 0.0)
    return h


if __name__ == "__main__":
    root = jax.random.PRNGKey(0)
    kp, kx1, kx2 = jax.random.split(root, 3)

    params = init_params(kp)
    prepped = prepare_params(params)   # one-time weight prep, outside the call path

    # --- small batch (single grid step, ragged block > array rows) ---
    batch1 = 8
    x1 = jax.random.normal(kx1, (batch1, INPUT_SIZE), jnp.float32)
    out1 = jax.block_until_ready(net_threat_model_v0(x1, prepped))
    ref1 = reference_forward(x1, params)
    assert out1.shape == (batch1, NUM_CLASSES)
    # bf16 weights/activations -> loosened tolerance vs the f32 reference
    assert jnp.allclose(out1, ref1, atol=5e-2, rtol=5e-2), \
        float(jnp.max(jnp.abs(out1 - ref1)))

    # --- multi-step grid with a ragged last batch tile (300 = 2*128 + 44) ---
    batch2 = 300
    x2 = jax.random.normal(kx2, (batch2, INPUT_SIZE), jnp.float32)
    out2 = jax.block_until_ready(net_threat_model_v0(x2, prepped, tb_max=128))
    ref2 = reference_forward(x2, params)
    assert out2.shape == (batch2, NUM_CLASSES)
    assert jnp.allclose(out2, ref2, atol=5e-2, rtol=5e-2), \
        float(jnp.max(jnp.abs(out2 - ref2)))

    print("KERNEL_OK")
</pallas_src>

<mosaic_0001>
module attributes {stable_mosaic.version = 11 : i64} {
  func.func @mlp_kernel(%arg0: i32, %arg1: memref<16x78xf32, #tpu.memory_space<vmem>>, %arg2: memref<78x128xbf16, #tpu.memory_space<vmem>>, %arg3: memref<1x128xf32, #tpu.memory_space<vmem>>, %arg4: memref<128x64xbf16, #tpu.memory_space<vmem>>, %arg5: memref<1x64xf32, #tpu.memory_space<vmem>>, %arg6: memref<64x32xbf16, #tpu.memory_space<vmem>>, %arg7: memref<1x32xf32, #tpu.memory_space<vmem>>, %arg8: memref<32x15xbf16, #tpu.memory_space<vmem>>, %arg9: memref<1x15xf32, #tpu.memory_space<vmem>>, %arg10: memref<16x15xf32, #tpu.memory_space<vmem>>) attributes {dimension_semantics = [#tpu.dimension_semantics<parallel>], iteration_bounds = array<i64: 1>, scalar_prefetch = 0 : i64, scratch_operands = 0 : i64, tpu.core_type = #tpu.core_type<tc>, window_params = [{transform_indices = @transform_0, window_bounds = array<i64: 16, 78>}, {pipeline_mode = #tpu.pipeline_mode<synchronous>, transform_indices = @transform_1, window_bounds = array<i64: 78, 128>}, {pipeline_mode = #tpu.pipeline_mode<synchronous>, transform_indices = @transform_2, window_bounds = array<i64: 1, 128>}, {pipeline_mode = #tpu.pipeline_mode<synchronous>, transform_indices = @transform_3, window_bounds = array<i64: 128, 64>}, {pipeline_mode = #tpu.pipeline_mode<synchronous>, transform_indices = @transform_4, window_bounds = array<i64: 1, 64>}, {pipeline_mode = #tpu.pipeline_mode<synchronous>, transform_indices = @transform_5, window_bounds = array<i64: 64, 32>}, {pipeline_mode = #tpu.pipeline_mode<synchronous>, transform_indices = @transform_6, window_bounds = array<i64: 1, 32>}, {pipeline_mode = #tpu.pipeline_mode<synchronous>, transform_indices = @transform_7, window_bounds = array<i64: 32, 15>}, {pipeline_mode = #tpu.pipeline_mode<synchronous>, transform_indices = @transform_8, window_bounds = array<i64: 1, 15>}, {transform_indices = @transform_9, window_bounds = array<i64: 16, 15>}]} {
    %c0 = arith.constant 0 : index
    %c0_0 = arith.constant 0 : index
    %0 = vector.load %arg1[%c0, %c0_0] : memref<16x78xf32, #tpu.memory_space<vmem>>, vector<16x78xf32>
    %1 = arith.truncf %0 : vector<16x78xf32> to vector<16x78xbf16>
    %c0_1 = arith.constant 0 : index
    %c0_2 = arith.constant 0 : index
    %2 = vector.load %arg2[%c0_1, %c0_2] : memref<78x128xbf16, #tpu.memory_space<vmem>>, vector<78x128xbf16>
    %cst = arith.constant dense<0.000000e+00> : vector<16x128xf32>
    %3 = tpu.matmul %1, %2, %cst {dimension_numbers = #tpu.dot_dimension_numbers<[1], [0], [0], [1], [0, 0, 1, 1], [], []>} : vector<16x78xbf16>, vector<78x128xbf16>, vector<16x128xf32> -> vector<16x128xf32>
    %c0_3 = arith.constant 0 : index
    %c0_4 = arith.constant 0 : index
    %4 = vector.load %arg3[%c0_3, %c0_4] : memref<1x128xf32, #tpu.memory_space<vmem>>, vector<1x128xf32>
    %5 = vector.broadcast %4 : vector<1x128xf32> to vector<16x128xf32>
    %6 = arith.addf %3, %5 : vector<16x128xf32>
    %cst_5 = arith.constant 0.000000e+00 : f32
    %7 = vector.broadcast %cst_5 : f32 to vector<16x128xf32>
    %8 = arith.maximumf %6, %7 : vector<16x128xf32>
    %9 = arith.truncf %8 : vector<16x128xf32> to vector<16x128xbf16>
    %c0_6 = arith.constant 0 : index
    %c0_7 = arith.constant 0 : index
    %10 = vector.load %arg4[%c0_6, %c0_7] : memref<128x64xbf16, #tpu.memory_space<vmem>>, vector<128x64xbf16>
    %cst_8 = arith.constant dense<0.000000e+00> : vector<16x64xf32>
    %11 = tpu.matmul %9, %10, %cst_8 {dimension_numbers = #tpu.dot_dimension_numbers<[1], [0], [0], [1], [0, 0, 1, 1], [], []>} : vector<16x128xbf16>, vector<128x64xbf16>, vector<16x64xf32> -> vector<16x64xf32>
    %c0_9 = arith.constant 0 : index
    %c0_10 = arith.constant 0 : index
    %12 = vector.load %arg5[%c0_9, %c0_10] : memref<1x64xf32, #tpu.memory_space<vmem>>, vector<1x64xf32>
    %13 = vector.broadcast %12 : vector<1x64xf32> to vector<16x64xf32>
    %14 = arith.addf %11, %13 : vector<16x64xf32>
    %cst_11 = arith.constant 0.000000e+00 : f32
    %15 = vector.broadcast %cst_11 : f32 to vector<16x64xf32>
    %16 = arith.maximumf %14, %15 : vector<16x64xf32>
    %17 = arith.truncf %16 : vector<16x64xf32> to vector<16x64xbf16>
    %c0_12 = arith.constant 0 : index
    %c0_13 = arith.constant 0 : index
    %18 = vector.load %arg6[%c0_12, %c0_13] : memref<64x32xbf16, #tpu.memory_space<vmem>>, vector<64x32xbf16>
    %cst_14 = arith.constant dense<0.000000e+00> : vector<16x32xf32>
    %19 = tpu.matmul %17, %18, %cst_14 {dimension_numbers = #tpu.dot_dimension_numbers<[1], [0], [0], [1], [0, 0, 1, 1], [], []>} : vector<16x64xbf16>, vector<64x32xbf16>, vector<16x32xf32> -> vector<16x32xf32>
    %c0_15 = arith.constant 0 : index
    %c0_16 = arith.constant 0 : index
    %20 = vector.load %arg7[%c0_15, %c0_16] : memref<1x32xf32, #tpu.memory_space<vmem>>, vector<1x32xf32>
    %21 = vector.broadcast %20 : vector<1x32xf32> to vector<16x32xf32>
    %22 = arith.addf %19, %21 : vector<16x32xf32>
    %cst_17 = arith.constant 0.000000e+00 : f32
    %23 = vector.broadcast %cst_17 : f32 to vector<16x32xf32>
    %24 = arith.maximumf %22, %23 : vector<16x32xf32>
    %25 = arith.truncf %24 : vector<16x32xf32> to vector<16x32xbf16>
    %c0_18 = arith.constant 0 : index
    %c0_19 = arith.constant 0 : index
    %26 = vector.load %arg8[%c0_18, %c0_19] : memref<32x15xbf16, #tpu.memory_space<vmem>>, vector<32x15xbf16>
    %cst_20 = arith.constant dense<0.000000e+00> : vector<16x15xf32>
    %27 = tpu.matmul %25, %26, %cst_20 {dimension_numbers = #tpu.dot_dimension_numbers<[1], [0], [0], [1], [0, 0, 1, 1], [], []>} : vector<16x32xbf16>, vector<32x15xbf16>, vector<16x15xf32> -> vector<16x15xf32>
    %c0_21 = arith.constant 0 : index
    %c0_22 = arith.constant 0 : index
    %28 = vector.load %arg9[%c0_21, %c0_22] : memref<1x15xf32, #tpu.memory_space<vmem>>, vector<1x15xf32>
    %29 = vector.broadcast %28 : vector<1x15xf32> to vector<16x15xf32>
    %30 = arith.addf %27, %29 : vector<16x15xf32>
    %c0_23 = arith.constant 0 : index
    %c0_24 = arith.constant 0 : index
    %31 = vector.load %arg10[%c0_23, %c0_24] : memref<16x15xf32, #tpu.memory_space<vmem>>, vector<16x15xf32>
    tpu.vector_store %arg10[%c0_23, %c0_24], %30 {strides = array<i32>} : memref<16x15xf32, #tpu.memory_space<vmem>>, vector<16x15xf32>,
    return
  }
  func.func @transform_0(%arg0: i32) -> (i32, i32) {
    %c0_i32 = arith.constant 0 : i32
    %c0_i32_0 = arith.constant 0 : i32
    return %arg0, %c0_i32 : i32, i32
  }
  func.func @transform_1(%arg0: i32) -> (i32, i32) {
    %c0_i32 = arith.constant 0 : i32
    %c0_i32_0 = arith.constant 0 : i32
    %c0_i32_1 = arith.constant 0 : i32
    return %c0_i32, %c0_i32_0 : i32, i32
  }
  func.func @transform_2(%arg0: i32) -> (i32, i32) {
    %c0_i32 = arith.constant 0 : i32
    %c0_i32_0 = arith.constant 0 : i32
    %c0_i32_1 = arith.constant 0 : i32
    return %c0_i32, %c0_i32_0 : i32, i32
  }
  func.func @transform_3(%arg0: i32) -> (i32, i32) {
    %c0_i32 = arith.constant 0 : i32
    %c0_i32_0 = arith.constant 0 : i32
    %c0_i32_1 = arith.constant 0 : i32
    return %c0_i32, %c0_i32_0 : i32, i32
  }
  func.func @transform_4(%arg0: i32) -> (i32, i32) {
    %c0_i32 = arith.constant 0 : i32
    %c0_i32_0 = arith.constant 0 : i32
    %c0_i32_1 = arith.constant 0 : i32
    return %c0_i32, %c0_i32_0 : i32, i32
  }
  func.func @transform_5(%arg0: i32) -> (i32, i32) {
    %c0_i32 = arith.constant 0 : i32
    %c0_i32_0 = arith.constant 0 : i32
    %c0_i32_1 = arith.constant 0 : i32
    return %c0_i32, %c0_i32_0 : i32, i32
  }
  func.func @transform_6(%arg0: i32) -> (i32, i32) {
    %c0_i32 = arith.constant 0 : i32
    %c0_i32_0 = arith.constant 0 : i32
    %c0_i32_1 = arith.constant 0 : i32
    return %c0_i32, %c0_i32_0 : i32, i32
  }
  func.func @transform_7(%arg0: i32) -> (i32, i32) {
    %c0_i32 = arith.constant 0 : i32
    %c0_i32_0 = arith.constant 0 : i32
    %c0_i32_1 = arith.constant 0 : i32
    return %c0_i32, %c0_i32_0 : i32, i32
  }
  func.func @transform_8(%arg0: i32) -> (i32, i32) {
    %c0_i32 = arith.constant 0 : i32
    %c0_i32_0 = arith.constant 0 : i32
    %c0_i32_1 = arith.constant 0 : i32
    return %c0_i32, %c0_i32_0 : i32, i32
  }
  func.func @transform_9(%arg0: i32) -> (i32, i32) {
    %c0_i32 = arith.constant 0 : i32
    %c0_i32_0 = arith.constant 0 : i32
    return %arg0, %c0_i32 : i32, i32
  }
}

</mosaic_0001>

<llo_original>
// kernel: net_threat_model_v0.1
$region0: #{net_threat_model_v0.1}
  #allocation0 [shape = 'u32[]', space=smem, size = 0x4, offset = 0x4, fixed_abs, tag = 'smem constant byte address 0x4 - core index']
  #allocation1 [shape = 'u32[72,128]{1,0:T(1,128)}', space=vmem, size = 0x9000, scoped, tag = 'internal scratch']
  %s0 = inlined_call_operand.vmem [shape: f32[8,78], index: 0, kind: input, shape index: {}]
  %s1 = inlined_call_operand.vmem [shape: bf16[78,128], index: 1, kind: input, shape index: {}]
  %s2 = inlined_call_operand.vmem [shape: f32[1,128], index: 2, kind: input, shape index: {}]
  %s3 = inlined_call_operand.vmem [shape: bf16[128,64], index: 3, kind: input, shape index: {}]
  %s4 = inlined_call_operand.vmem [shape: f32[1,64], index: 4, kind: input, shape index: {}]
  %s5 = inlined_call_operand.vmem [shape: bf16[64,32], index: 5, kind: input, shape index: {}]
  %s6 = inlined_call_operand.vmem [shape: f32[1,32], index: 6, kind: input, shape index: {}]
  %s7 = inlined_call_operand.vmem [shape: bf16[32,15], index: 7, kind: input, shape index: {}]
  %s8 = inlined_call_operand.vmem [shape: f32[1,15], index: 8, kind: input, shape index: {}]
  %s9 = inlined_call_operand.hbm [shape: f32[8,15], index: 9, kind: output, shape index: {}]
  %s10 = sld [smem:[#allocation0]]
  $region46: #{net_threat_model_v0.1} parent=0
    _
  %s12 = ssub.s32 1, %s10
  %s13 = scalar_select 0, %s12, %s10
  $region1: #{net_threat_model_v0.1} parent=0
    #allocation2 [shape = 'u8[8192]{0}', space=vmem, size = 0x2000, scoped, tag = 'output window, operand 0, single buffered']
    #allocation3 [shape = 's32[1]{0}', space=sflag, size = 0x4, scoped, tag = 'scoped memory for net_threat_model_v0.1']
    %14 = vsyncpa [#allocation3], 0
    // Predicated region
    $region2: #{net_threat_model_v0.1} parent=1 // pred_check
      _
    $region3: #{net_threat_model_v0.1} parent=1 // pred_check_branch
      %16 = sbr.rel (0) target = $region5
    $region4: #{net_threat_model_v0.1} parent=1 // pred_region
      _
    $region5: #{net_threat_model_v0.1} parent=1 // pred_fallthru
      _
    // Predicated region
    $region6: #{net_threat_model_v0.1} parent=1 // pred_check
      _
    $region7: #{net_threat_model_v0.1} parent=1 // pred_check_branch
      %18 = sbr.rel (0) target = $region9
    $region8: #{net_threat_model_v0.1} parent=1 // pred_region
      _
    $region9: #{net_threat_model_v0.1} parent=1 // pred_fallthru
      _
    // Predicated region
    $region10: #{net_threat_model_v0.1} parent=1 // pred_check
      _
    $region11: #{net_threat_model_v0.1} parent=1 // pred_check_branch
      %20 = sbr.rel (0) target = $region13
    $region12: #{net_threat_model_v0.1} parent=1 // pred_region
      _
    $region13: #{net_threat_model_v0.1} parent=1 // pred_fallthru
      _
    // Predicated region
    $region14: #{net_threat_model_v0.1} parent=1 // pred_check
      _
    $region15: #{net_threat_model_v0.1} parent=1 // pred_check_branch
      %22 = sbr.rel (0) target = $region17
    $region16: #{net_threat_model_v0.1} parent=1 // pred_region
      _
    $region17: #{net_threat_model_v0.1} parent=1 // pred_fallthru
      _
    // Predicated region
    $region18: #{net_threat_model_v0.1} parent=1 // pred_check
      _
    $region19: #{net_threat_model_v0.1} parent=1 // pred_check_branch
      %24 = sbr.rel (0) target = $region21
    $region20: #{net_threat_model_v0.1} parent=1 // pred_region
      _
    $region21: #{net_threat_model_v0.1} parent=1 // pred_fallthru
      _
    // Predicated region
    $region22: #{net_threat_model_v0.1} parent=1 // pred_check
      _
    $region23: #{net_threat_model_v0.1} parent=1 // pred_check_branch
      %26 = sbr.rel (0) target = $region25
    $region24: #{net_threat_model_v0.1} parent=1 // pred_region
      _
    $region25: #{net_threat_model_v0.1} parent=1 // pred_fallthru
      _
    // Predicated region
    $region26: #{net_threat_model_v0.1} parent=1 // pred_check
      _
    $region27: #{net_threat_model_v0.1} parent=1 // pred_check_branch
      %28 = sbr.rel (0) target = $region29
    $region28: #{net_threat_model_v0.1} parent=1 // pred_region
      _
    $region29: #{net_threat_model_v0.1} parent=1 // pred_fallthru
      _
    // Predicated region
    $region30: #{net_threat_model_v0.1} parent=1 // pred_check
      _
    $region31: #{net_threat_model_v0.1} parent=1 // pred_check_branch
      %30 = sbr.rel (0) target = $region33
    $region32: #{net_threat_model_v0.1} parent=1 // pred_region
      _
    $region33: #{net_threat_model_v0.1} parent=1 // pred_fallthru
      _
    // Predicated region
    $region34: #{net_threat_model_v0.1} parent=1 // pred_check
      _
    $region35: #{net_threat_model_v0.1} parent=1 // pred_check_branch
      %32 = sbr.rel (0) target = $region37
    $region36: #{net_threat_model_v0.1} parent=1 // pred_region
      _
    $region37: #{net_threat_model_v0.1} parent=1 // pred_fallthru
      _
    %v34 = vld [vmem:[%s0] sm:$0xff]
    %v35 = vld [vmem:[%s0 + $0x8] sm:$0xff]
    %v36 = vpack.c.bf16 %v35, %v34
    %v37 = vld [vmem:[%s1] sm:$0xf]
    %v38 = vld [vmem:[%s1 + $0x4] sm:$0xf]
    %v39 = vld [vmem:[%s1 + $0x8] sm:$0xf]
    %v40 = vld [vmem:[%s1 + $0xc] sm:$0xf]
    %v41 = vld [vmem:[%s1 + $0x10] sm:$0xf]
    %v42 = vld [vmem:[%s1 + $0x14] sm:$0xf]
    %v43 = vld [vmem:[%s1 + $0x18] sm:$0xf]
    %v44 = vld [vmem:[%s1 + $0x1c] sm:$0xf]
    %v45 = vld [vmem:[%s1 + $0x20] sm:$0xf]
    %v46 = vld [vmem:[%s1 + $0x24] sm:$0x7]
    %v47 = vld [vmem:[%s2] sm:$0x1]
    %v49 = vperm.slane %v47, 0
    %v61 = vunpack.c.l.b16 %v37
    %v62 = vunpack.c.l.b16 %v38
    %v63 = vunpack.c.l.b16 %v39
    %v64 = vunpack.c.l.b16 %v40
    %v65 = vunpack.c.l.b16 %v41
    %v66 = vunpack.c.l.b16 %v42
    %v67 = vunpack.c.l.b16 %v43
    %v68 = vunpack.c.l.b16 %v44
    %v69 = vunpack.c.l.b16 %v45
    %v70 = vunpack.c.l.b16 %v46
    %v71 = vpack.c.b16 %v62, %v61
    %v72 = vpack.c.b16 %v64, %v63
    %v73 = vpack.c.b16 %v66, %v65
    %v74 = vpack.c.b16 %v68, %v67
    %v75 = vpack.c.b16 %v70, %v69
    %vm80 = vcmask 637952
    %v82 = vsel %vm80, %v36, 0
    %vm84 = vcmask 1046528
    %v86 = vsel %vm84, %v75, 0
    %88 = vmatpush.bf16.msra.mxu0 0
    %89 = vmatpush.bf16.msra.mxu0 0
    %90 = vmatpush.bf16.msra.mxu0 0
    %91 = vmatpush.bf16.msra.mxu0 %v86
    %92 = vmatpush.bf16.msra.mxu0 %v74
    %93 = vmatpush.bf16.msra.mxu0 %v73
    %94 = vmatpush.bf16.msra.mxu0 %v72
    %95 = vmatpush.bf16.msra.mxu0 %v71
    %96 = vmatmul.bf16.gmra.mxu0 %v82
    %v97 = vpop.f32.mrf.mxu0
    %v98 = vadd.f32 %v49, %v97
    %v99 = vpop.f32.mrf.mxu0
    %v100 = vadd.f32 %v49, %v99
    %101 = vdwg.mxu0
    %v102 = vmax.f32 %v98, 0.0
    %v103 = vmax.f32 %v100, 0.0
    %v104 = vpack.c.bf16 %v103, %v102
    %v105 = vld [vmem:[%s3] sm:$0xf]
    %v106 = vld [vmem:[%s3 + $0x4] sm:$0xf]
    %v107 = vld [vmem:[%s3 + $0x8] sm:$0xf]
    %v108 = vld [vmem:[%s3 + $0xc] sm:$0xf]
    %v109 = vld [vmem:[%s3 + $0x10] sm:$0xf]
    %v110 = vld [vmem:[%s3 + $0x14] sm:$0xf]
    %v111 = vld [vmem:[%s3 + $0x18] sm:$0xf]
    %v112 = vld [vmem:[%s3 + $0x1c] sm:$0xf]
    %v113 = vld [vmem:[%s3 + $0x20] sm:$0xf]
    %v114 = vld [vmem:[%s3 + $0x24] sm:$0xf]
    %v115 = vld [vmem:[%s3 + $0x28] sm:$0xf]
    %v116 = vld [vmem:[%s3 + $0x2c] sm:$0xf]
    %v117 = vld [vmem:[%s3 + $0x30] sm:$0xf]
    %v118 = vld [vmem:[%s3 + $0x34] sm:$0xf]
    %v119 = vld [vmem:[%s3 + $0x38] sm:$0xf]
    %v120 = vld [vmem:[%s3 + $0x3c] sm:$0xf]
    %v121 = vld [vmem:[%s4] sm:$0x1]
    %v123 = vperm.slane %v121, 0
    %v141 = vunpack.c.l.b16 %v105
    %v142 = vunpack.c.l.b16 %v106
    %v143 = vunpack.c.l.b16 %v107
    %v144 = vunpack.c.l.b16 %v108
    %v145 = vunpack.c.l.b16 %v109
    %v146 = vunpack.c.l.b16 %v110
    %v147 = vunpack.c.l.b16 %v111
    %v148 = vunpack.c.l.b16 %v112
    %v149 = vunpack.c.l.b16 %v113
    %v150 = vunpack.c.l.b16 %v114
    %v151 = vunpack.c.l.b16 %v115
    %v152 = vunpack.c.l.b16 %v116
    %v153 = vunpack.c.l.b16 %v117
    %v154 = vunpack.c.l.b16 %v118
    %v155 = vunpack.c.l.b16 %v119
    %v156 = vunpack.c.l.b16 %v120
    %v157 = vpack.c.b16 %v142, %v141
    %v158 = vpack.c.b16 %v144, %v143
    %v159 = vpack.c.b16 %v146, %v145
    %v160 = vpack.c.b16 %v148, %v147
    %v161 = vpack.c.b16 %v150, %v149
    %v162 = vpack.c.b16 %v152, %v151
    %v163 = vpack.c.b16 %v154, %v153
    %v164 = vpack.c.b16 %v156, %v155
    %173 = vmatpush.bf16.msra.mxu0 %v164
    %174 = vmatpush.bf16.msra.mxu0 %v163
    %175 = vmatpush.bf16.msra.mxu0 %v162
    %176 = vmatpush.bf16.msra.mxu0 %v161
    %177 = vmatpush.bf16.msra.mxu0 %v160
    %178 = vmatpush.bf16.msra.mxu0 %v159
    %179 = vmatpush.bf16.msra.mxu0 %v158
    %180 = vmatpush.bf16.msra.mxu0 %v157
    %181 = vmatmul.bf16.gmra.mxu0 %v104
    %v182 = vpop.f32.mrf.mxu0
    %v183 = vadd.f32 %v123, %v182
    %v184 = vpop.f32.mrf.mxu0
    %v185 = vadd.f32 %v123, %v184
    %186 = vdwg.mxu0
    %v187 = vmax.f32 %v183, 0.0
    %v188 = vmax.f32 %v185, 0.0
    %v189 = vpack.c.bf16 %v188, %v187
    %v190 = vld [vmem:[%s5] sm:$0xf]
    %v191 = vld [vmem:[%s5 + $0x4] sm:$0xf]
    %v192 = vld [vmem:[%s5 + $0x8] sm:$0xf]
    %v193 = vld [vmem:[%s5 + $0xc] sm:$0xf]
    %v194 = vld [vmem:[%s5 + $0x10] sm:$0xf]
    %v195 = vld [vmem:[%s5 + $0x14] sm:$0xf]
    %v196 = vld [vmem:[%s5 + $0x18] sm:$0xf]
    %v197 = vld [vmem:[%s5 + $0x1c] sm:$0xf]
    %v198 = vld [vmem:[%s6] sm:$0x1]
    %v200 = vperm.slane %v198, 0
    %v210 = vunpack.c.l.b16 %v190
    %v211 = vunpack.c.l.b16 %v191
    %v212 = vunpack.c.l.b16 %v192
    %v213 = vunpack.c.l.b16 %v193
    %v214 = vunpack.c.l.b16 %v194
    %v215 = vunpack.c.l.b16 %v195
    %v216 = vunpack.c.l.b16 %v196
    %v217 = vunpack.c.l.b16 %v197
    %v218 = vpack.c.b16 %v211, %v210
    %v219 = vpack.c.b16 %v213, %v212
    %v220 = vpack.c.b16 %v215, %v214
    %v221 = vpack.c.b16 %v217, %v216
    %vm226 = vcmask 523264
    %v228 = vsel %vm226, %v189, 0
    %230 = vmatpush.bf16.msra.mxu0 0
    %231 = vmatpush.bf16.msra.mxu0 0
    %232 = vmatpush.bf16.msra.mxu0 0
    %233 = vmatpush.bf16.msra.mxu0 0
    %234 = vmatpush.bf16.msra.mxu0 %v221
    %235 = vmatpush.bf16.msra.mxu0 %v220
    %236 = vmatpush.bf16.msra.mxu0 %v219
    %237 = vmatpush.bf16.msra.mxu0 %v218
    %238 = vmatmul.bf16.gmra.mxu0 %v228
    %v239 = vpop.f32.mrf.mxu0
    %v240 = vadd.f32 %v200, %v239
    %v241 = vpop.f32.mrf.mxu0
    %v242 = vadd.f32 %v200, %v241
    %243 = vdwg.mxu0
    %v244 = vmax.f32 %v240, 0.0
    %v245 = vmax.f32 %v242, 0.0
    %v246 = vpack.c.bf16 %v245, %v244
    %v247 = vld [vmem:[%s7] sm:$0xf]
    %v248 = vld [vmem:[%s7 + $0x4] sm:$0xf]
    %v249 = vld [vmem:[%s7 + $0x8] sm:$0xf]
    %v250 = vld [vmem:[%s7 + $0xc] sm:$0xf]
    %v251 = vld [vmem:[%s8] sm:$0x1]
    %v253 = vperm.slane %v251, 0
    %v259 = vunpack.c.l.b16 %v247
    %v260 = vunpack.c.l.b16 %v248
    %v261 = vunpack.c.l.b16 %v249
    %v262 = vunpack.c.l.b16 %v250
    %v263 = vpack.c.b16 %v260, %v259
    %v264 = vpack.c.b16 %v262, %v261
    %vm267 = vcmask 261120
    %v269 = vsel %vm267, %v246, 0
    %271 = vmatpush.bf16.msra.mxu0 0
    %272 = vmatpush.bf16.msra.mxu0 0
    %273 = vmatpush.bf16.msra.mxu0 0
    %274 = vmatpush.bf16.msra.mxu0 0
    %275 = vmatpush.bf16.msra.mxu0 0
    %276 = vmatpush.bf16.msra.mxu0 0
    %277 = vmatpush.bf16.msra.mxu0 %v264
    %278 = vmatpush.bf16.msra.mxu0 %v263
    %279 = vmatmul.bf16.gmra.mxu0 %v269
    %v280 = vpop.f32.mrf.mxu0
    %v281 = vadd.f32 %v253, %v280
    %v282 = vpop.f32.mrf.mxu0
    %v283 = vadd.f32 %v253, %v282
    %284 = vdwg.mxu0
    %vm285 = vcmask 121856
    %286 = vst.msk [vmem:[#allocation2] sm:$0xff] %vm285, %v281
    %287 = vst.msk [vmem:[#allocation2 + $0x8] sm:$0xff] %vm285, %v283
    // Predicated region
    $region38: #{net_threat_model_v0.1} parent=1 // pred_check
      _
    $region39: #{net_threat_model_v0.1} parent=1 // pred_check_branch
      %289 = sbr.rel (0) target = $region41
    $region40: #{net_threat_model_v0.1} parent=1 // pred_region
      %291 = vsyncadd [#allocation3], 128
      %s292 = sshll.u32 [#allocation2], 4
      %s293 = int_to_ptr.vmem [resolvable:$true] %s292
      %s294 = sshll.u32 %s9, 4
      %s295 = int_to_ptr.hbm [resolvable:$true] %s294
      %300 = dma.vmem_to_hbm [thread:$0]  %s293, 128, %s295, [#allocation3], 128, 128, 8
    $region41: #{net_threat_model_v0.1} parent=1 // pred_fallthru
      _
    // Predicated region
    $region42: #{net_threat_model_v0.1} parent=1 // pred_check
      _
    $region43: #{net_threat_model_v0.1} parent=1 // pred_check_branch
      %302 = sbr.rel (0) target = $region45
    $region44: #{net_threat_model_v0.1} parent=1 // pred_region
      %304 = dma.done [#allocation3], 256
    $region45: #{net_threat_model_v0.1} parent=1 // pred_fallthru
      _
    %305 = vsyncpa [#allocation3], 1

</llo_original>
